<compile_context>
chip_gen: v5e
topology: v5e:2x2
jax: 0.10.0
libtpu: 0.0.40
codegen_flags: <defaults>
</compile_context>

<pallas_src>
import functools

import jax
import jax.numpy as jnp
from jax import lax
from jax.experimental import pallas as pl
from jax.experimental.pallas import tpu as pltpu


# ----------------------------- in-kernel helpers -----------------------------
def _per_channel_total(v, c, w):
    """v: (1, W*c) lane vector.  Returns (1, W*c) where every lane holds the
    total over all lanes with the same channel index (lane % c), i.e. the
    per-channel sum broadcast back onto the lane axis.  Exact f32 adds; the
    lane rotations run on the XLU slot."""
    total = v
    for k in range(1, w):
        total = total + pltpu.roll(v, shift=k * c, axis=1)
    return total


def _conv_bn_relu_stage(ap_ref, t_ref, gamma_d, beta_d, *, w, c_out, count):
    """Fused 3x3 'same' conv + train-mode BatchNorm2d + ReLU on lane-dense rows.

    ap_ref  : (N, H+2, W*c_in)  H-zero-padded activations (VMEM scratch/ref)
    t_ref   : (3, W*c_in, W*c_out) row-Toeplitz conv weights (W padding folded)
    gamma_d, beta_d : (1, W*c_out)  BN affine params pre-tiled onto lanes
    returns : (N*H, W*c_out) float32
    """
    n, hp, wc_in = ap_ref.shape
    h = hp - 2
    wc_out = w * c_out

    # 3x3 convolution == 3 row-Toeplitz MXU matmuls (one per kernel row),
    # K = W*c_in per dot, f32 accumulation.
    y = jnp.zeros((n * h, wc_out), jnp.float32)
    for dy in range(3):
        rows = ap_ref[:, dy:dy + h, :].reshape(n * h, wc_in)
        y = y + jnp.dot(rows, t_ref[dy], preferred_element_type=jnp.float32)

    # BatchNorm2d training statistics (biased variance over N*H*W), kept
    # lane-dense: per-channel sums via exact roll-based coset reduction.
    col_sum = jnp.sum(y, axis=0, keepdims=True)                    # (1, W*c_out)
    mean_d = _per_channel_total(col_sum, c_out, w) / count
    cen = y - mean_d
    var_d = _per_channel_total(jnp.sum(cen * cen, axis=0, keepdims=True),
                               c_out, w) / count

    # BN folded to one per-channel scale/shift FMA.  The conv bias is omitted
    # entirely: a per-channel constant is exactly cancelled by the batch-mean
    # subtraction of train-mode BN.
    scale_d = gamma_d * lax.rsqrt(var_d + 1e-5)
    shift_d = beta_d - mean_d * scale_d
    return jnp.maximum(y * scale_d + shift_d, 0.0)                 # ReLU


def _double_conv_kernel(x_ref, t1_ref, g1_ref, b1_ref, t2_ref, g2_ref, b2_ref,
                        o_ref, p1_ref, p2_ref, *, w, c_in, c_mid, c_out):
    n, h, _ = x_ref.shape
    count = float(n * h * w)

    # ---------------- stage 1: conv3x3 + BN + ReLU ----------------
    # In-kernel 'same' padding along H (W padding lives in the weights).
    p1_ref[:, 0:1, :] = jnp.zeros((n, 1, w * c_in), jnp.float32)
    p1_ref[:, h + 1:h + 2, :] = jnp.zeros((n, 1, w * c_in), jnp.float32)
    p1_ref[:, 1:h + 1, :] = x_ref[...]
    h1 = _conv_bn_relu_stage(p1_ref, t1_ref, g1_ref[...], b1_ref[...],
                             w=w, c_out=c_mid, count=count)

    # ---------------- stage 2: conv3x3 + BN + ReLU ----------------
    p2_ref[:, 0:1, :] = jnp.zeros((n, 1, w * c_mid), jnp.float32)
    p2_ref[:, h + 1:h + 2, :] = jnp.zeros((n, 1, w * c_mid), jnp.float32)
    p2_ref[:, 1:h + 1, :] = h1.reshape(n, h, w * c_mid)
    y = _conv_bn_relu_stage(p2_ref, t2_ref, g2_ref[...], b2_ref[...],
                            w=w, c_out=c_out, count=count)

    # Lane-dense output store (minor dim = W*c_out, a multiple of 128 here).
    o_ref[...] = y.reshape(n, h, w * c_out).astype(o_ref.dtype)


# ------------------------------ wrapper / glue -------------------------------
def _conv3x3_row_toeplitz(wgt, w):
    """PyTorch conv weight (c_out, c_in, 3, 3) -> (3, W*c_in, W*c_out).

    T[dy] maps one input row (W*c_in lanes, w-major / c-minor) to one output
    row (W*c_out lanes).  The W-direction 'same' padding is folded in: taps
    that would read outside [0, W) are simply dropped (they hit zero padding).
    """
    c_out, c_in = wgt.shape[0], wgt.shape[1]
    taps = jnp.transpose(wgt, (2, 3, 1, 0)).astype(jnp.float32)   # (ky,kx,cin,cout)
    t = jnp.zeros((3, w * c_in, w * c_out), jnp.float32)
    for dy in range(3):
        for dx in range(3):
            blk = taps[dy, dx]                                     # (c_in, c_out)
            for x0 in range(w):
                xi = x0 + dx - 1                                   # input column
                if 0 <= xi < w:
                    t = t.at[dy,
                             xi * c_in:(xi + 1) * c_in,
                             x0 * c_out:(x0 + 1) * c_out].set(blk)
    return t


def _double_conv_pallas(x_rows, t1, g1d, b1d, t2, g2d, b2d, *, w, c_in, c_mid, c_out):
    n, h, _ = x_rows.shape
    vmem = pl.BlockSpec(memory_space=pltpu.MemorySpace.VMEM)
    kernel = functools.partial(_double_conv_kernel,
                               w=w, c_in=c_in, c_mid=c_mid, c_out=c_out)
    return pl.pallas_call(
        kernel,
        out_shape=jax.ShapeDtypeStruct((n, h, w * c_out), jnp.float32),
        in_specs=[vmem] * 7,
        out_specs=vmem,
        scratch_shapes=[pltpu.VMEM((n, h + 2, w * c_in), jnp.float32),
                        pltpu.VMEM((n, h + 2, w * c_mid), jnp.float32)],
        compiler_params=pltpu.CompilerParams(vmem_limit_bytes=32 * 1024 * 1024),
    )(x_rows, t1, g1d, b1d, t2, g2d, b2d)


@jax.jit
def double_conv(x_nchw, params):
    """Pallas DoubleConv forward. x_nchw: (N, Cin, H, W) -> (N, Cout, H, W)."""
    (w1, _b1, g1, be1), (w2, _b2, g2, be2) = params   # conv biases folded away by BN
    n, c_in, h, w = x_nchw.shape
    c_mid, c_out = w1.shape[0], w2.shape[0]

    # Layout / parameter glue in plain JAX (cheap, once per call):
    #   activations -> lane-dense rows (N, H, W*C);
    #   conv weights -> row-Toeplitz matrices with W 'same' padding folded in;
    #   BN gamma/beta -> pre-tiled onto the lane axis.
    x_rows = jnp.transpose(x_nchw, (0, 2, 3, 1)).reshape(n, h, w * c_in)
    t1 = _conv3x3_row_toeplitz(w1, w)
    t2 = _conv3x3_row_toeplitz(w2, w)
    g1d = jnp.tile(g1.reshape(1, c_mid).astype(jnp.float32), (1, w))
    b1d = jnp.tile(be1.reshape(1, c_mid).astype(jnp.float32), (1, w))
    g2d = jnp.tile(g2.reshape(1, c_out).astype(jnp.float32), (1, w))
    b2d = jnp.tile(be2.reshape(1, c_out).astype(jnp.float32), (1, w))

    y_rows = _double_conv_pallas(x_rows.astype(jnp.float32), t1, g1d, b1d,
                                 t2, g2d, b2d,
                                 w=w, c_in=c_in, c_mid=c_mid, c_out=c_out)
    return jnp.transpose(y_rows.reshape(n, h, w, c_out), (0, 3, 1, 2))


# ---------------- pure-JAX reference (for correctness check) ----------------
def _ref_block(x_nchw, w, b, gamma, beta):
    y = lax.conv_general_dilated(
        x_nchw, w, window_strides=(1, 1), padding=((1, 1), (1, 1)),
        dimension_numbers=("NCHW", "OIHW", "NCHW"))
    y = y + b.reshape(1, -1, 1, 1)
    mean = jnp.mean(y, axis=(0, 2, 3), keepdims=True)
    var = jnp.mean((y - mean) ** 2, axis=(0, 2, 3), keepdims=True)
    y = (y - mean) * lax.rsqrt(var + 1e-5)
    y = y * gamma.reshape(1, -1, 1, 1) + beta.reshape(1, -1, 1, 1)
    return jnp.maximum(y, 0.0)


def double_conv_ref(x_nchw, params):
    (w1, b1, g1, be1), (w2, b2, g2, be2) = params
    return _ref_block(_ref_block(x_nchw, w1, b1, g1, be1), w2, b2, g2, be2)


if __name__ == "__main__":
    # DoubleConv(nin=4, nout=8)  =>  nmid = nout = 8
    N, Cin, H, W = 2, 4, 16, 16
    Cmid, Cout = 8, 8

    key = jax.random.PRNGKey(0)
    kx, kw1, kb1, kw2, kb2 = jax.random.split(key, 5)

    x = jax.random.normal(kx, (N, Cin, H, W), jnp.float32)

    # Deterministic parameter init (shapes match nn.Conv2d / nn.BatchNorm2d).
    w1 = jax.random.normal(kw1, (Cmid, Cin, 3, 3), jnp.float32) / jnp.sqrt(Cin * 9.0)
    b1 = 0.1 * jax.random.normal(kb1, (Cmid,), jnp.float32)
    w2 = jax.random.normal(kw2, (Cout, Cmid, 3, 3), jnp.float32) / jnp.sqrt(Cmid * 9.0)
    b2 = 0.1 * jax.random.normal(kb2, (Cout,), jnp.float32)
    g1, be1 = jnp.ones((Cmid,), jnp.float32), jnp.zeros((Cmid,), jnp.float32)
    g2, be2 = jnp.ones((Cout,), jnp.float32), jnp.zeros((Cout,), jnp.float32)

    params = ((w1, b1, g1, be1), (w2, b2, g2, be2))

    out = jax.block_until_ready(double_conv(x, params))
    ref = double_conv_ref(x, params)

    assert out.shape == (N, Cout, H, W), out.shape
    err = float(jnp.max(jnp.abs(out - ref)))
    assert err < 5e-4, f"max abs err {err}"

    print("KERNEL_OK")
</pallas_src>

<mosaic_0001>
module attributes {stable_mosaic.version = 11 : i64} {
  func.func @_double_conv_kernel(%arg0: memref<2x16x64xf32, #tpu.memory_space<vmem>>, %arg1: memref<3x64x128xf32, #tpu.memory_space<vmem>>, %arg2: memref<1x128xf32, #tpu.memory_space<vmem>>, %arg3: memref<1x128xf32, #tpu.memory_space<vmem>>, %arg4: memref<3x128x128xf32, #tpu.memory_space<vmem>>, %arg5: memref<1x128xf32, #tpu.memory_space<vmem>>, %arg6: memref<1x128xf32, #tpu.memory_space<vmem>>, %arg7: memref<2x16x128xf32, #tpu.memory_space<vmem>>, %arg8: memref<2x18x64xf32, #tpu.memory_space<vmem>>, %arg9: memref<2x18x128xf32, #tpu.memory_space<vmem>>) attributes {dimension_semantics = [], scalar_prefetch = 0 : i64, scratch_operands = 2 : i64, tpu.core_type = #tpu.core_type<tc>} {
    %cst = arith.constant 0.000000e+00 : f32
    %0 = vector.broadcast %cst : f32 to vector<2x1x64xf32>
    %c0 = arith.constant 0 : index
    %c0_0 = arith.constant 0 : index
    %c0_1 = arith.constant 0 : index
    %1 = vector.load %arg8[%c0, %c0_0, %c0_1] : memref<2x18x64xf32, #tpu.memory_space<vmem>>, vector<2x1x64xf32>
    tpu.vector_store %arg8[%c0, %c0_0, %c0_1], %0 {strides = array<i32>} : memref<2x18x64xf32, #tpu.memory_space<vmem>>, vector<2x1x64xf32>,
    %cst_2 = arith.constant 0.000000e+00 : f32
    %2 = vector.broadcast %cst_2 : f32 to vector<2x1x64xf32>
    %c0_3 = arith.constant 0 : index
    %c17 = arith.constant 17 : index
    %c0_4 = arith.constant 0 : index
    %3 = vector.load %arg8[%c0_3, %c17, %c0_4] : memref<2x18x64xf32, #tpu.memory_space<vmem>>, vector<2x1x64xf32>
    tpu.vector_store %arg8[%c0_3, %c17, %c0_4], %2 {strides = array<i32>} : memref<2x18x64xf32, #tpu.memory_space<vmem>>, vector<2x1x64xf32>,
    %c0_5 = arith.constant 0 : index
    %c0_6 = arith.constant 0 : index
    %c0_7 = arith.constant 0 : index
    %4 = vector.load %arg0[%c0_5, %c0_6, %c0_7] : memref<2x16x64xf32, #tpu.memory_space<vmem>>, vector<2x16x64xf32>
    %c0_8 = arith.constant 0 : index
    %c1 = arith.constant 1 : index
    %c0_9 = arith.constant 0 : index
    %5 = vector.load %arg8[%c0_8, %c1, %c0_9] : memref<2x18x64xf32, #tpu.memory_space<vmem>>, vector<2x16x64xf32>
    tpu.vector_store %arg8[%c0_8, %c1, %c0_9], %4 {strides = array<i32>} : memref<2x18x64xf32, #tpu.memory_space<vmem>>, vector<2x16x64xf32>,
    %c0_10 = arith.constant 0 : index
    %c0_11 = arith.constant 0 : index
    %6 = vector.load %arg2[%c0_10, %c0_11] : memref<1x128xf32, #tpu.memory_space<vmem>>, vector<1x128xf32>
    %c0_12 = arith.constant 0 : index
    %c0_13 = arith.constant 0 : index
    %7 = vector.load %arg3[%c0_12, %c0_13] : memref<1x128xf32, #tpu.memory_space<vmem>>, vector<1x128xf32>
    %cst_14 = arith.constant 0.000000e+00 : f32
    %8 = vector.broadcast %cst_14 : f32 to vector<32x128xf32>
    %c0_15 = arith.constant 0 : index
    %c0_16 = arith.constant 0 : index
    %c0_17 = arith.constant 0 : index
    %9 = vector.load %arg8[%c0_15, %c0_16, %c0_17] : memref<2x18x64xf32, #tpu.memory_space<vmem>>, vector<2x16x64xf32>
    %10 = vector.shape_cast %9 : vector<2x16x64xf32> to vector<32x64xf32>
    %c0_18 = arith.constant 0 : index
    %c0_19 = arith.constant 0 : index
    %c0_20 = arith.constant 0 : index
    %11 = vector.load %arg1[%c0_18, %c0_19, %c0_20] : memref<3x64x128xf32, #tpu.memory_space<vmem>>, vector<1x64x128xf32>
    %12 = vector.shape_cast %11 : vector<1x64x128xf32> to vector<64x128xf32>
    %cst_21 = arith.constant dense<0.000000e+00> : vector<32x128xf32>
    %13 = tpu.matmul %10, %12, %cst_21 {dimension_numbers = #tpu.dot_dimension_numbers<[1], [0], [0], [1], [0, 0, 1, 1], [], []>} : vector<32x64xf32>, vector<64x128xf32>, vector<32x128xf32> -> vector<32x128xf32>
    %14 = arith.addf %8, %13 : vector<32x128xf32>
    %c0_22 = arith.constant 0 : index
    %c1_23 = arith.constant 1 : index
    %c0_24 = arith.constant 0 : index
    %15 = vector.load %arg8[%c0_22, %c1_23, %c0_24] : memref<2x18x64xf32, #tpu.memory_space<vmem>>, vector<2x16x64xf32>
    %16 = vector.shape_cast %15 : vector<2x16x64xf32> to vector<32x64xf32>
    %c1_25 = arith.constant 1 : index
    %c0_26 = arith.constant 0 : index
    %c0_27 = arith.constant 0 : index
    %17 = vector.load %arg1[%c1_25, %c0_26, %c0_27] : memref<3x64x128xf32, #tpu.memory_space<vmem>>, vector<1x64x128xf32>
    %18 = vector.shape_cast %17 : vector<1x64x128xf32> to vector<64x128xf32>
    %cst_28 = arith.constant dense<0.000000e+00> : vector<32x128xf32>
    %19 = tpu.matmul %16, %18, %cst_28 {dimension_numbers = #tpu.dot_dimension_numbers<[1], [0], [0], [1], [0, 0, 1, 1], [], []>} : vector<32x64xf32>, vector<64x128xf32>, vector<32x128xf32> -> vector<32x128xf32>
    %20 = arith.addf %14, %19 : vector<32x128xf32>
    %c0_29 = arith.constant 0 : index
    %c2 = arith.constant 2 : index
    %c0_30 = arith.constant 0 : index
    %21 = vector.load %arg8[%c0_29, %c2, %c0_30] : memref<2x18x64xf32, #tpu.memory_space<vmem>>, vector<2x16x64xf32>
    %22 = vector.shape_cast %21 : vector<2x16x64xf32> to vector<32x64xf32>
    %c2_31 = arith.constant 2 : index
    %c0_32 = arith.constant 0 : index
    %c0_33 = arith.constant 0 : index
    %23 = vector.load %arg1[%c2_31, %c0_32, %c0_33] : memref<3x64x128xf32, #tpu.memory_space<vmem>>, vector<1x64x128xf32>
    %24 = vector.shape_cast %23 : vector<1x64x128xf32> to vector<64x128xf32>
    %cst_34 = arith.constant dense<0.000000e+00> : vector<32x128xf32>
    %25 = tpu.matmul %22, %24, %cst_34 {dimension_numbers = #tpu.dot_dimension_numbers<[1], [0], [0], [1], [0, 0, 1, 1], [], []>} : vector<32x64xf32>, vector<64x128xf32>, vector<32x128xf32> -> vector<32x128xf32>
    %26 = arith.addf %20, %25 : vector<32x128xf32>
    %cst_35 = arith.constant dense<0.000000e+00> : vector<128xf32>
    %27 = vector.multi_reduction <add>, %26, %cst_35 [0] : vector<32x128xf32> to vector<128xf32>
    %28 = vector.shape_cast %27 : vector<128xf32> to vector<1x128xf32>
    %c8_i32 = arith.constant 8 : i32
    %29 = tpu.dynamic_rotate %28 by %c8_i32 dim 1 : vector<1x128xf32>, i32 -> vector<1x128xf32>
    %30 = arith.addf %28, %29 : vector<1x128xf32>
    %c16_i32 = arith.constant 16 : i32
    %31 = tpu.dynamic_rotate %28 by %c16_i32 dim 1 : vector<1x128xf32>, i32 -> vector<1x128xf32>
    %32 = arith.addf %30, %31 : vector<1x128xf32>
    %c24_i32 = arith.constant 24 : i32
    %33 = tpu.dynamic_rotate %28 by %c24_i32 dim 1 : vector<1x128xf32>, i32 -> vector<1x128xf32>
    %34 = arith.addf %32, %33 : vector<1x128xf32>
    %c32_i32 = arith.constant 32 : i32
    %35 = tpu.dynamic_rotate %28 by %c32_i32 dim 1 : vector<1x128xf32>, i32 -> vector<1x128xf32>
    %36 = arith.addf %34, %35 : vector<1x128xf32>
    %c40_i32 = arith.constant 40 : i32
    %37 = tpu.dynamic_rotate %28 by %c40_i32 dim 1 : vector<1x128xf32>, i32 -> vector<1x128xf32>
    %38 = arith.addf %36, %37 : vector<1x128xf32>
    %c48_i32 = arith.constant 48 : i32
    %39 = tpu.dynamic_rotate %28 by %c48_i32 dim 1 : vector<1x128xf32>, i32 -> vector<1x128xf32>
    %40 = arith.addf %38, %39 : vector<1x128xf32>
    %c56_i32 = arith.constant 56 : i32
    %41 = tpu.dynamic_rotate %28 by %c56_i32 dim 1 : vector<1x128xf32>, i32 -> vector<1x128xf32>
    %42 = arith.addf %40, %41 : vector<1x128xf32>
    %c64_i32 = arith.constant 64 : i32
    %43 = tpu.dynamic_rotate %28 by %c64_i32 dim 1 : vector<1x128xf32>, i32 -> vector<1x128xf32>
    %44 = arith.addf %42, %43 : vector<1x128xf32>
    %c72_i32 = arith.constant 72 : i32
    %45 = tpu.dynamic_rotate %28 by %c72_i32 dim 1 : vector<1x128xf32>, i32 -> vector<1x128xf32>
    %46 = arith.addf %44, %45 : vector<1x128xf32>
    %c80_i32 = arith.constant 80 : i32
    %47 = tpu.dynamic_rotate %28 by %c80_i32 dim 1 : vector<1x128xf32>, i32 -> vector<1x128xf32>
    %48 = arith.addf %46, %47 : vector<1x128xf32>
    %c88_i32 = arith.constant 88 : i32
    %49 = tpu.dynamic_rotate %28 by %c88_i32 dim 1 : vector<1x128xf32>, i32 -> vector<1x128xf32>
    %50 = arith.addf %48, %49 : vector<1x128xf32>
    %c96_i32 = arith.constant 96 : i32
    %51 = tpu.dynamic_rotate %28 by %c96_i32 dim 1 : vector<1x128xf32>, i32 -> vector<1x128xf32>
    %52 = arith.addf %50, %51 : vector<1x128xf32>
    %c104_i32 = arith.constant 104 : i32
    %53 = tpu.dynamic_rotate %28 by %c104_i32 dim 1 : vector<1x128xf32>, i32 -> vector<1x128xf32>
    %54 = arith.addf %52, %53 : vector<1x128xf32>
    %c112_i32 = arith.constant 112 : i32
    %55 = tpu.dynamic_rotate %28 by %c112_i32 dim 1 : vector<1x128xf32>, i32 -> vector<1x128xf32>
    %56 = arith.addf %54, %55 : vector<1x128xf32>
    %c120_i32 = arith.constant 120 : i32
    %57 = tpu.dynamic_rotate %28 by %c120_i32 dim 1 : vector<1x128xf32>, i32 -> vector<1x128xf32>
    %58 = arith.addf %56, %57 : vector<1x128xf32>
    %cst_36 = arith.constant 5.120000e+02 : f32
    %59 = vector.broadcast %cst_36 : f32 to vector<1x128xf32>
    %60 = arith.divf %58, %59 : vector<1x128xf32>
    %61 = vector.broadcast %60 : vector<1x128xf32> to vector<32x128xf32>
    %62 = arith.subf %26, %61 : vector<32x128xf32>
    %63 = arith.mulf %62, %62 : vector<32x128xf32>
    %cst_37 = arith.constant dense<0.000000e+00> : vector<128xf32>
    %64 = vector.multi_reduction <add>, %63, %cst_37 [0] : vector<32x128xf32> to vector<128xf32>
    %65 = vector.shape_cast %64 : vector<128xf32> to vector<1x128xf32>
    %c8_i32_38 = arith.constant 8 : i32
    %66 = tpu.dynamic_rotate %65 by %c8_i32_38 dim 1 : vector<1x128xf32>, i32 -> vector<1x128xf32>
    %67 = arith.addf %65, %66 : vector<1x128xf32>
    %c16_i32_39 = arith.constant 16 : i32
    %68 = tpu.dynamic_rotate %65 by %c16_i32_39 dim 1 : vector<1x128xf32>, i32 -> vector<1x128xf32>
    %69 = arith.addf %67, %68 : vector<1x128xf32>
    %c24_i32_40 = arith.constant 24 : i32
    %70 = tpu.dynamic_rotate %65 by %c24_i32_40 dim 1 : vector<1x128xf32>, i32 -> vector<1x128xf32>
    %71 = arith.addf %69, %70 : vector<1x128xf32>
    %c32_i32_41 = arith.constant 32 : i32
    %72 = tpu.dynamic_rotate %65 by %c32_i32_41 dim 1 : vector<1x128xf32>, i32 -> vector<1x128xf32>
    %73 = arith.addf %71, %72 : vector<1x128xf32>
    %c40_i32_42 = arith.constant 40 : i32
    %74 = tpu.dynamic_rotate %65 by %c40_i32_42 dim 1 : vector<1x128xf32>, i32 -> vector<1x128xf32>
    %75 = arith.addf %73, %74 : vector<1x128xf32>
    %c48_i32_43 = arith.constant 48 : i32
    %76 = tpu.dynamic_rotate %65 by %c48_i32_43 dim 1 : vector<1x128xf32>, i32 -> vector<1x128xf32>
    %77 = arith.addf %75, %76 : vector<1x128xf32>
    %c56_i32_44 = arith.constant 56 : i32
    %78 = tpu.dynamic_rotate %65 by %c56_i32_44 dim 1 : vector<1x128xf32>, i32 -> vector<1x128xf32>
    %79 = arith.addf %77, %78 : vector<1x128xf32>
    %c64_i32_45 = arith.constant 64 : i32
    %80 = tpu.dynamic_rotate %65 by %c64_i32_45 dim 1 : vector<1x128xf32>, i32 -> vector<1x128xf32>
    %81 = arith.addf %79, %80 : vector<1x128xf32>
    %c72_i32_46 = arith.constant 72 : i32
    %82 = tpu.dynamic_rotate %65 by %c72_i32_46 dim 1 : vector<1x128xf32>, i32 -> vector<1x128xf32>
    %83 = arith.addf %81, %82 : vector<1x128xf32>
    %c80_i32_47 = arith.constant 80 : i32
    %84 = tpu.dynamic_rotate %65 by %c80_i32_47 dim 1 : vector<1x128xf32>, i32 -> vector<1x128xf32>
    %85 = arith.addf %83, %84 : vector<1x128xf32>
    %c88_i32_48 = arith.constant 88 : i32
    %86 = tpu.dynamic_rotate %65 by %c88_i32_48 dim 1 : vector<1x128xf32>, i32 -> vector<1x128xf32>
    %87 = arith.addf %85, %86 : vector<1x128xf32>
    %c96_i32_49 = arith.constant 96 : i32
    %88 = tpu.dynamic_rotate %65 by %c96_i32_49 dim 1 : vector<1x128xf32>, i32 -> vector<1x128xf32>
    %89 = arith.addf %87, %88 : vector<1x128xf32>
    %c104_i32_50 = arith.constant 104 : i32
    %90 = tpu.dynamic_rotate %65 by %c104_i32_50 dim 1 : vector<1x128xf32>, i32 -> vector<1x128xf32>
    %91 = arith.addf %89, %90 : vector<1x128xf32>
    %c112_i32_51 = arith.constant 112 : i32
    %92 = tpu.dynamic_rotate %65 by %c112_i32_51 dim 1 : vector<1x128xf32>, i32 -> vector<1x128xf32>
    %93 = arith.addf %91, %92 : vector<1x128xf32>
    %c120_i32_52 = arith.constant 120 : i32
    %94 = tpu.dynamic_rotate %65 by %c120_i32_52 dim 1 : vector<1x128xf32>, i32 -> vector<1x128xf32>
    %95 = arith.addf %93, %94 : vector<1x128xf32>
    %cst_53 = arith.constant 5.120000e+02 : f32
    %96 = vector.broadcast %cst_53 : f32 to vector<1x128xf32>
    %97 = arith.divf %95, %96 : vector<1x128xf32>
    %cst_54 = arith.constant 9.99999974E-6 : f32
    %98 = vector.broadcast %cst_54 : f32 to vector<1x128xf32>
    %99 = arith.addf %97, %98 : vector<1x128xf32>
    %100 = math.rsqrt %99 : vector<1x128xf32>
    %101 = arith.mulf %6, %100 : vector<1x128xf32>
    %102 = arith.mulf %60, %101 : vector<1x128xf32>
    %103 = arith.subf %7, %102 : vector<1x128xf32>
    %104 = vector.broadcast %101 : vector<1x128xf32> to vector<32x128xf32>
    %105 = arith.mulf %26, %104 : vector<32x128xf32>
    %106 = vector.broadcast %103 : vector<1x128xf32> to vector<32x128xf32>
    %107 = arith.addf %105, %106 : vector<32x128xf32>
    %cst_55 = arith.constant 0.000000e+00 : f32
    %108 = vector.broadcast %cst_55 : f32 to vector<32x128xf32>
    %109 = arith.maximumf %107, %108 : vector<32x128xf32>
    %cst_56 = arith.constant 0.000000e+00 : f32
    %110 = vector.broadcast %cst_56 : f32 to vector<2x1x128xf32>
    %c0_57 = arith.constant 0 : index
    %c0_58 = arith.constant 0 : index
    %c0_59 = arith.constant 0 : index
    %111 = vector.load %arg9[%c0_57, %c0_58, %c0_59] : memref<2x18x128xf32, #tpu.memory_space<vmem>>, vector<2x1x128xf32>
    tpu.vector_store %arg9[%c0_57, %c0_58, %c0_59], %110 {strides = array<i32>} : memref<2x18x128xf32, #tpu.memory_space<vmem>>, vector<2x1x128xf32>,
    %cst_60 = arith.constant 0.000000e+00 : f32
    %112 = vector.broadcast %cst_60 : f32 to vector<2x1x128xf32>
    %c0_61 = arith.constant 0 : index
    %c17_62 = arith.constant 17 : index
    %c0_63 = arith.constant 0 : index
    %113 = vector.load %arg9[%c0_61, %c17_62, %c0_63] : memref<2x18x128xf32, #tpu.memory_space<vmem>>, vector<2x1x128xf32>
    tpu.vector_store %arg9[%c0_61, %c17_62, %c0_63], %112 {strides = array<i32>} : memref<2x18x128xf32, #tpu.memory_space<vmem>>, vector<2x1x128xf32>,
    %114 = vector.shape_cast %109 : vector<32x128xf32> to vector<2x16x128xf32>
    %c0_64 = arith.constant 0 : index
    %c1_65 = arith.constant 1 : index
    %c0_66 = arith.constant 0 : index
    %115 = vector.load %arg9[%c0_64, %c1_65, %c0_66] : memref<2x18x128xf32, #tpu.memory_space<vmem>>, vector<2x16x128xf32>
    tpu.vector_store %arg9[%c0_64, %c1_65, %c0_66], %114 {strides = array<i32>} : memref<2x18x128xf32, #tpu.memory_space<vmem>>, vector<2x16x128xf32>,
    %c0_67 = arith.constant 0 : index
    %c0_68 = arith.constant 0 : index
    %116 = vector.load %arg5[%c0_67, %c0_68] : memref<1x128xf32, #tpu.memory_space<vmem>>, vector<1x128xf32>
    %c0_69 = arith.constant 0 : index
    %c0_70 = arith.constant 0 : index
    %117 = vector.load %arg6[%c0_69, %c0_70] : memref<1x128xf32, #tpu.memory_space<vmem>>, vector<1x128xf32>
    %cst_71 = arith.constant 0.000000e+00 : f32
    %118 = vector.broadcast %cst_71 : f32 to vector<32x128xf32>
    %c0_72 = arith.constant 0 : index
    %c0_73 = arith.constant 0 : index
    %c0_74 = arith.constant 0 : index
    %119 = vector.load %arg9[%c0_72, %c0_73, %c0_74] : memref<2x18x128xf32, #tpu.memory_space<vmem>>, vector<2x16x128xf32>
    %120 = vector.shape_cast %119 : vector<2x16x128xf32> to vector<32x128xf32>
    %c0_75 = arith.constant 0 : index
    %c0_76 = arith.constant 0 : index
    %c0_77 = arith.constant 0 : index
    %121 = vector.load %arg4[%c0_75, %c0_76, %c0_77] : memref<3x128x128xf32, #tpu.memory_space<vmem>>, vector<1x128x128xf32>
    %122 = vector.shape_cast %121 : vector<1x128x128xf32> to vector<128x128xf32>
    %cst_78 = arith.constant dense<0.000000e+00> : vector<32x128xf32>
    %123 = tpu.matmul %120, %122, %cst_78 {dimension_numbers = #tpu.dot_dimension_numbers<[1], [0], [0], [1], [0, 0, 1, 1], [], []>} : vector<32x128xf32>, vector<128x128xf32>, vector<32x128xf32> -> vector<32x128xf32>
    %124 = arith.addf %118, %123 : vector<32x128xf32>
    %c0_79 = arith.constant 0 : index
    %c1_80 = arith.constant 1 : index
    %c0_81 = arith.constant 0 : index
    %125 = vector.load %arg9[%c0_79, %c1_80, %c0_81] : memref<2x18x128xf32, #tpu.memory_space<vmem>>, vector<2x16x128xf32>
    %126 = vector.shape_cast %125 : vector<2x16x128xf32> to vector<32x128xf32>
    %c1_82 = arith.constant 1 : index
    %c0_83 = arith.constant 0 : index
    %c0_84 = arith.constant 0 : index
    %127 = vector.load %arg4[%c1_82, %c0_83, %c0_84] : memref<3x128x128xf32, #tpu.memory_space<vmem>>, vector<1x128x128xf32>
    %128 = vector.shape_cast %127 : vector<1x128x128xf32> to vector<128x128xf32>
    %cst_85 = arith.constant dense<0.000000e+00> : vector<32x128xf32>
    %129 = tpu.matmul %126, %128, %cst_85 {dimension_numbers = #tpu.dot_dimension_numbers<[1], [0], [0], [1], [0, 0, 1, 1], [], []>} : vector<32x128xf32>, vector<128x128xf32>, vector<32x128xf32> -> vector<32x128xf32>
    %130 = arith.addf %124, %129 : vector<32x128xf32>
    %c0_86 = arith.constant 0 : index
    %c2_87 = arith.constant 2 : index
    %c0_88 = arith.constant 0 : index
    %131 = vector.load %arg9[%c0_86, %c2_87, %c0_88] : memref<2x18x128xf32, #tpu.memory_space<vmem>>, vector<2x16x128xf32>
    %132 = vector.shape_cast %131 : vector<2x16x128xf32> to vector<32x128xf32>
    %c2_89 = arith.constant 2 : index
    %c0_90 = arith.constant 0 : index
    %c0_91 = arith.constant 0 : index
    %133 = vector.load %arg4[%c2_89, %c0_90, %c0_91] : memref<3x128x128xf32, #tpu.memory_space<vmem>>, vector<1x128x128xf32>
    %134 = vector.shape_cast %133 : vector<1x128x128xf32> to vector<128x128xf32>
    %cst_92 = arith.constant dense<0.000000e+00> : vector<32x128xf32>
    %135 = tpu.matmul %132, %134, %cst_92 {dimension_numbers = #tpu.dot_dimension_numbers<[1], [0], [0], [1], [0, 0, 1, 1], [], []>} : vector<32x128xf32>, vector<128x128xf32>, vector<32x128xf32> -> vector<32x128xf32>
    %136 = arith.addf %130, %135 : vector<32x128xf32>
    %cst_93 = arith.constant dense<0.000000e+00> : vector<128xf32>
    %137 = vector.multi_reduction <add>, %136, %cst_93 [0] : vector<32x128xf32> to vector<128xf32>
    %138 = vector.shape_cast %137 : vector<128xf32> to vector<1x128xf32>
    %c8_i32_94 = arith.constant 8 : i32
    %139 = tpu.dynamic_rotate %138 by %c8_i32_94 dim 1 : vector<1x128xf32>, i32 -> vector<1x128xf32>
    %140 = arith.addf %138, %139 : vector<1x128xf32>
    %c16_i32_95 = arith.constant 16 : i32
    %141 = tpu.dynamic_rotate %138 by %c16_i32_95 dim 1 : vector<1x128xf32>, i32 -> vector<1x128xf32>
    %142 = arith.addf %140, %141 : vector<1x128xf32>
    %c24_i32_96 = arith.constant 24 : i32
    %143 = tpu.dynamic_rotate %138 by %c24_i32_96 dim 1 : vector<1x128xf32>, i32 -> vector<1x128xf32>
    %144 = arith.addf %142, %143 : vector<1x128xf32>
    %c32_i32_97 = arith.constant 32 : i32
    %145 = tpu.dynamic_rotate %138 by %c32_i32_97 dim 1 : vector<1x128xf32>, i32 -> vector<1x128xf32>
    %146 = arith.addf %144, %145 : vector<1x128xf32>
    %c40_i32_98 = arith.constant 40 : i32
    %147 = tpu.dynamic_rotate %138 by %c40_i32_98 dim 1 : vector<1x128xf32>, i32 -> vector<1x128xf32>
    %148 = arith.addf %146, %147 : vector<1x128xf32>
    %c48_i32_99 = arith.constant 48 : i32
    %149 = tpu.dynamic_rotate %138 by %c48_i32_99 dim 1 : vector<1x128xf32>, i32 -> vector<1x128xf32>
    %150 = arith.addf %148, %149 : vector<1x128xf32>
    %c56_i32_100 = arith.constant 56 : i32
    %151 = tpu.dynamic_rotate %138 by %c56_i32_100 dim 1 : vector<1x128xf32>, i32 -> vector<1x128xf32>
    %152 = arith.addf %150, %151 : vector<1x128xf32>
    %c64_i32_101 = arith.constant 64 : i32
    %153 = tpu.dynamic_rotate %138 by %c64_i32_101 dim 1 : vector<1x128xf32>, i32 -> vector<1x128xf32>
    %154 = arith.addf %152, %153 : vector<1x128xf32>
    %c72_i32_102 = arith.constant 72 : i32
    %155 = tpu.dynamic_rotate %138 by %c72_i32_102 dim 1 : vector<1x128xf32>, i32 -> vector<1x128xf32>
    %156 = arith.addf %154, %155 : vector<1x128xf32>
    %c80_i32_103 = arith.constant 80 : i32
    %157 = tpu.dynamic_rotate %138 by %c80_i32_103 dim 1 : vector<1x128xf32>, i32 -> vector<1x128xf32>
    %158 = arith.addf %156, %157 : vector<1x128xf32>
    %c88_i32_104 = arith.constant 88 : i32
    %159 = tpu.dynamic_rotate %138 by %c88_i32_104 dim 1 : vector<1x128xf32>, i32 -> vector<1x128xf32>
    %160 = arith.addf %158, %159 : vector<1x128xf32>
    %c96_i32_105 = arith.constant 96 : i32
    %161 = tpu.dynamic_rotate %138 by %c96_i32_105 dim 1 : vector<1x128xf32>, i32 -> vector<1x128xf32>
    %162 = arith.addf %160, %161 : vector<1x128xf32>
    %c104_i32_106 = arith.constant 104 : i32
    %163 = tpu.dynamic_rotate %138 by %c104_i32_106 dim 1 : vector<1x128xf32>, i32 -> vector<1x128xf32>
    %164 = arith.addf %162, %163 : vector<1x128xf32>
    %c112_i32_107 = arith.constant 112 : i32
    %165 = tpu.dynamic_rotate %138 by %c112_i32_107 dim 1 : vector<1x128xf32>, i32 -> vector<1x128xf32>
    %166 = arith.addf %164, %165 : vector<1x128xf32>
    %c120_i32_108 = arith.constant 120 : i32
    %167 = tpu.dynamic_rotate %138 by %c120_i32_108 dim 1 : vector<1x128xf32>, i32 -> vector<1x128xf32>
    %168 = arith.addf %166, %167 : vector<1x128xf32>
    %cst_109 = arith.constant 5.120000e+02 : f32
    %169 = vector.broadcast %cst_109 : f32 to vector<1x128xf32>
    %170 = arith.divf %168, %169 : vector<1x128xf32>
    %171 = vector.broadcast %170 : vector<1x128xf32> to vector<32x128xf32>
    %172 = arith.subf %136, %171 : vector<32x128xf32>
    %173 = arith.mulf %172, %172 : vector<32x128xf32>
    %cst_110 = arith.constant dense<0.000000e+00> : vector<128xf32>
    %174 = vector.multi_reduction <add>, %173, %cst_110 [0] : vector<32x128xf32> to vector<128xf32>
    %175 = vector.shape_cast %174 : vector<128xf32> to vector<1x128xf32>
    %c8_i32_111 = arith.constant 8 : i32
    %176 = tpu.dynamic_rotate %175 by %c8_i32_111 dim 1 : vector<1x128xf32>, i32 -> vector<1x128xf32>
    %177 = arith.addf %175, %176 : vector<1x128xf32>
    %c16_i32_112 = arith.constant 16 : i32
    %178 = tpu.dynamic_rotate %175 by %c16_i32_112 dim 1 : vector<1x128xf32>, i32 -> vector<1x128xf32>
    %179 = arith.addf %177, %178 : vector<1x128xf32>
    %c24_i32_113 = arith.constant 24 : i32
    %180 = tpu.dynamic_rotate %175 by %c24_i32_113 dim 1 : vector<1x128xf32>, i32 -> vector<1x128xf32>
    %181 = arith.addf %179, %180 : vector<1x128xf32>
    %c32_i32_114 = arith.constant 32 : i32
    %182 = tpu.dynamic_rotate %175 by %c32_i32_114 dim 1 : vector<1x128xf32>, i32 -> vector<1x128xf32>
    %183 = arith.addf %181, %182 : vector<1x128xf32>
    %c40_i32_115 = arith.constant 40 : i32
    %184 = tpu.dynamic_rotate %175 by %c40_i32_115 dim 1 : vector<1x128xf32>, i32 -> vector<1x128xf32>
    %185 = arith.addf %183, %184 : vector<1x128xf32>
    %c48_i32_116 = arith.constant 48 : i32
    %186 = tpu.dynamic_rotate %175 by %c48_i32_116 dim 1 : vector<1x128xf32>, i32 -> vector<1x128xf32>
    %187 = arith.addf %185, %186 : vector<1x128xf32>
    %c56_i32_117 = arith.constant 56 : i32
    %188 = tpu.dynamic_rotate %175 by %c56_i32_117 dim 1 : vector<1x128xf32>, i32 -> vector<1x128xf32>
    %189 = arith.addf %187, %188 : vector<1x128xf32>
    %c64_i32_118 = arith.constant 64 : i32
    %190 = tpu.dynamic_rotate %175 by %c64_i32_118 dim 1 : vector<1x128xf32>, i32 -> vector<1x128xf32>
    %191 = arith.addf %189, %190 : vector<1x128xf32>
    %c72_i32_119 = arith.constant 72 : i32
    %192 = tpu.dynamic_rotate %175 by %c72_i32_119 dim 1 : vector<1x128xf32>, i32 -> vector<1x128xf32>
    %193 = arith.addf %191, %192 : vector<1x128xf32>
    %c80_i32_120 = arith.constant 80 : i32
    %194 = tpu.dynamic_rotate %175 by %c80_i32_120 dim 1 : vector<1x128xf32>, i32 -> vector<1x128xf32>
    %195 = arith.addf %193, %194 : vector<1x128xf32>
    %c88_i32_121 = arith.constant 88 : i32
    %196 = tpu.dynamic_rotate %175 by %c88_i32_121 dim 1 : vector<1x128xf32>, i32 -> vector<1x128xf32>
    %197 = arith.addf %195, %196 : vector<1x128xf32>
    %c96_i32_122 = arith.constant 96 : i32
    %198 = tpu.dynamic_rotate %175 by %c96_i32_122 dim 1 : vector<1x128xf32>, i32 -> vector<1x128xf32>
    %199 = arith.addf %197, %198 : vector<1x128xf32>
    %c104_i32_123 = arith.constant 104 : i32
    %200 = tpu.dynamic_rotate %175 by %c104_i32_123 dim 1 : vector<1x128xf32>, i32 -> vector<1x128xf32>
    %201 = arith.addf %199, %200 : vector<1x128xf32>
    %c112_i32_124 = arith.constant 112 : i32
    %202 = tpu.dynamic_rotate %175 by %c112_i32_124 dim 1 : vector<1x128xf32>, i32 -> vector<1x128xf32>
    %203 = arith.addf %201, %202 : vector<1x128xf32>
    %c120_i32_125 = arith.constant 120 : i32
    %204 = tpu.dynamic_rotate %175 by %c120_i32_125 dim 1 : vector<1x128xf32>, i32 -> vector<1x128xf32>
    %205 = arith.addf %203, %204 : vector<1x128xf32>
    %cst_126 = arith.constant 5.120000e+02 : f32
    %206 = vector.broadcast %cst_126 : f32 to vector<1x128xf32>
    %207 = arith.divf %205, %206 : vector<1x128xf32>
    %cst_127 = arith.constant 9.99999974E-6 : f32
    %208 = vector.broadcast %cst_127 : f32 to vector<1x128xf32>
    %209 = arith.addf %207, %208 : vector<1x128xf32>
    %210 = math.rsqrt %209 : vector<1x128xf32>
    %211 = arith.mulf %116, %210 : vector<1x128xf32>
    %212 = arith.mulf %170, %211 : vector<1x128xf32>
    %213 = arith.subf %117, %212 : vector<1x128xf32>
    %214 = vector.broadcast %211 : vector<1x128xf32> to vector<32x128xf32>
    %215 = arith.mulf %136, %214 : vector<32x128xf32>
    %216 = vector.broadcast %213 : vector<1x128xf32> to vector<32x128xf32>
    %217 = arith.addf %215, %216 : vector<32x128xf32>
    %cst_128 = arith.constant 0.000000e+00 : f32
    %218 = vector.broadcast %cst_128 : f32 to vector<32x128xf32>
    %219 = arith.maximumf %217, %218 : vector<32x128xf32>
    %220 = vector.shape_cast %219 : vector<32x128xf32> to vector<2x16x128xf32>
    %c0_129 = arith.constant 0 : index
    %c0_130 = arith.constant 0 : index
    %c0_131 = arith.constant 0 : index
    %221 = vector.load %arg7[%c0_129, %c0_130, %c0_131] : memref<2x16x128xf32, #tpu.memory_space<vmem>>, vector<2x16x128xf32>
    tpu.vector_store %arg7[%c0_129, %c0_130, %c0_131], %220 {strides = array<i32>} : memref<2x16x128xf32, #tpu.memory_space<vmem>>, vector<2x16x128xf32>,
    return
  }
}

</mosaic_0001>

<llo_original>
// kernel: double_conv.1
$region0: #{double_conv.1}
  #allocation0 [shape = 'u32[]', space=smem, size = 0x4, offset = 0x4, fixed_abs, tag = 'smem constant byte address 0x4 - core index']
  #allocation1 [shape = 'u32[72,128]{1,0:T(1,128)}', space=vmem, size = 0x9000, scoped, tag = 'internal scratch']
  #allocation2 [shape = 'f32[2,18,64]{2,1,0:T(8,128)}', space=vmem, size = 0x6000, scoped, tag = 'scratch operand']
  #allocation3 [shape = 'f32[2,18,128]{2,1,0:T(8,128)}', space=vmem, size = 0x6000, scoped, tag = 'scratch operand']
  %s0 = inlined_call_operand.vmem [shape: f32[2,16,64], index: 0, kind: input, shape index: {}]
  %s1 = inlined_call_operand.vmem [shape: f32[3,64,128], index: 1, kind: input, shape index: {}]
  %s2 = inlined_call_operand.vmem [shape: f32[1,128], index: 2, kind: input, shape index: {}]
  %s3 = inlined_call_operand.vmem [shape: f32[1,128], index: 3, kind: input, shape index: {}]
  %s4 = inlined_call_operand.vmem [shape: f32[3,128,128], index: 4, kind: input, shape index: {}]
  %s5 = inlined_call_operand.vmem [shape: f32[1,128], index: 5, kind: input, shape index: {}]
  %s6 = inlined_call_operand.vmem [shape: f32[1,128], index: 6, kind: input, shape index: {}]
  %s7 = inlined_call_operand.vmem [shape: f32[2,16,128], index: 7, kind: output, shape index: {}]
  %s8 = sld [smem:[#allocation0]]
  $region38: #{double_conv.1} parent=0
    _
  %s10 = ssub.s32 1, %s8
  %s11 = scalar_select 0, %s10, %s8
  // Predicated region
  $region2: #{double_conv.1} parent=0 // pred_check
    _
  $region3: #{double_conv.1} parent=0 // pred_check_branch
    %13 = sbr.rel (0) target = $region5
  $region4: #{double_conv.1} parent=0 // pred_region
    _
  $region5: #{double_conv.1} parent=0 // pred_fallthru
    _
  // Predicated region
  $region6: #{double_conv.1} parent=0 // pred_check
    _
  $region7: #{double_conv.1} parent=0 // pred_check_branch
    %15 = sbr.rel (0) target = $region9
  $region8: #{double_conv.1} parent=0 // pred_region
    _
  $region9: #{double_conv.1} parent=0 // pred_fallthru
    _
  // Predicated region
  $region10: #{double_conv.1} parent=0 // pred_check
    _
  $region11: #{double_conv.1} parent=0 // pred_check_branch
    %17 = sbr.rel (0) target = $region13
  $region12: #{double_conv.1} parent=0 // pred_region
    _
  $region13: #{double_conv.1} parent=0 // pred_fallthru
    _
  // Predicated region
  $region14: #{double_conv.1} parent=0 // pred_check
    _
  $region15: #{double_conv.1} parent=0 // pred_check_branch
    %19 = sbr.rel (0) target = $region17
  $region16: #{double_conv.1} parent=0 // pred_region
    _
  $region17: #{double_conv.1} parent=0 // pred_fallthru
    _
  // Predicated region
  $region18: #{double_conv.1} parent=0 // pred_check
    _
  $region19: #{double_conv.1} parent=0 // pred_check_branch
    %21 = sbr.rel (0) target = $region21
  $region20: #{double_conv.1} parent=0 // pred_region
    _
  $region21: #{double_conv.1} parent=0 // pred_fallthru
    _
  // Predicated region
  $region22: #{double_conv.1} parent=0 // pred_check
    _
  $region23: #{double_conv.1} parent=0 // pred_check_branch
    %23 = sbr.rel (0) target = $region25
  $region24: #{double_conv.1} parent=0 // pred_region
    _
  $region25: #{double_conv.1} parent=0 // pred_fallthru
    _
  // Predicated region
  $region26: #{double_conv.1} parent=0 // pred_check
    _
  $region27: #{double_conv.1} parent=0 // pred_check_branch
    %25 = sbr.rel (0) target = $region29
  $region28: #{double_conv.1} parent=0 // pred_region
    _
  $region29: #{double_conv.1} parent=0 // pred_fallthru
    _
  %vm26 = vcmask 516096
  %27 = vst.msk [vmem:[#allocation2] sm:$0x1] %vm26, 0.0
  %28 = vst.msk [vmem:[#allocation2 + $0x18] sm:$0x1] %vm26, 0.0
  %29 = vst.msk [vmem:[#allocation2 + $0x11] sm:$0x1] %vm26, 0.0
  %30 = vst.msk [vmem:[#allocation2 + $0x29] sm:$0x1] %vm26, 0.0
  %v31 = vld [vmem:[%s0] sm:$0xff]
  %v32 = vld [vmem:[%s0 + $0x8] sm:$0xff]
  %v33 = vld [vmem:[%s0 + $0x10] sm:$0xff]
  %v34 = vld [vmem:[%s0 + $0x18] sm:$0xff]
  %vm35 = vcmask 523264
  %36 = vst.msk [vmem:[#allocation2 + $0x1] sm:$0xff] %vm35, %v31
  %37 = vst.msk [vmem:[#allocation2 + $0x9] sm:$0xff] %vm35, %v32
  %38 = vst.msk [vmem:[#allocation2 + $0x19] sm:$0xff] %vm35, %v33
  %39 = vst.msk [vmem:[#allocation2 + $0x21] sm:$0xff] %vm35, %v34
  %v40 = vld [vmem:[%s2] sm:$0x1]
  %v41 = vld [vmem:[%s3] sm:$0x1]
  %v42 = vld [vmem:[#allocation2] sm:$0xff]
  %v43 = vld [vmem:[#allocation2 + $0x8] sm:$0xff]
  %v44 = vld [vmem:[#allocation2 + $0x18] sm:$0xff]
  %v45 = vld [vmem:[#allocation2 + $0x20] sm:$0xff]
  %v46 = vld [vmem:[%s1] sm:$0xff]
  %v47 = vld [vmem:[%s1 + $0x8] sm:$0xff]
  %v48 = vld [vmem:[%s1 + $0x10] sm:$0xff]
  %v49 = vld [vmem:[%s1 + $0x18] sm:$0xff]
  %v50 = vld [vmem:[%s1 + $0x20] sm:$0xff]
  %v51 = vld [vmem:[%s1 + $0x28] sm:$0xff]
  %v52 = vld [vmem:[%s1 + $0x30] sm:$0xff]
  %v53 = vld [vmem:[%s1 + $0x38] sm:$0xff]
  %v54 = vld [vmem:[#allocation2 + $0x1] sm:$0xff]
  %v55 = vld [vmem:[#allocation2 + $0x9] sm:$0xff]
  %v56 = vld [vmem:[#allocation2 + $0x19] sm:$0xff]
  %v57 = vld [vmem:[#allocation2 + $0x21] sm:$0xff]
  %s58 = scalar_lea.vmem %s1, 64
  %v59 = vld [vmem:[%s58] sm:$0xff]
  %v60 = vld [vmem:[%s58 + $0x8] sm:$0xff]
  %v61 = vld [vmem:[%s58 + $0x10] sm:$0xff]
  %v62 = vld [vmem:[%s58 + $0x18] sm:$0xff]
  %v63 = vld [vmem:[%s58 + $0x20] sm:$0xff]
  %v64 = vld [vmem:[%s58 + $0x28] sm:$0xff]
  %v65 = vld [vmem:[%s58 + $0x30] sm:$0xff]
  %v66 = vld [vmem:[%s58 + $0x38] sm:$0xff]
  %v68 = vsel %vm35, %v54, 0
  %v71 = vsel %vm35, %v55, 0
  %v74 = vsel %vm35, %v56, 0
  %v77 = vsel %vm35, %v57, 0
  %79 = vmatpush.msra.mxu0 0.0
  %80 = vmatpush.msra.mxu0 0.0
  %81 = vmatpush.msra.mxu0 0.0
  %82 = vmatpush.msra.mxu0 0.0
  %83 = vmatpush.msra.mxu0 0.0
  %84 = vmatpush.msra.mxu0 0.0
  %85 = vmatpush.msra.mxu0 0.0
  %86 = vmatpush.msra.mxu0 0.0
  %87 = vmatpush.msra.mxu0 %v66
  %88 = vmatpush.msra.mxu0 %v65
  %89 = vmatpush.msra.mxu0 %v64
  %90 = vmatpush.msra.mxu0 %v63
  %91 = vmatpush.msra.mxu0 %v62
  %92 = vmatpush.msra.mxu0 %v61
  %93 = vmatpush.msra.mxu0 %v60
  %94 = vmatpush.msra.mxu0 %v59
  %95 = vmatmul.f32.gmra.mxu0 %v68
  %v96 = vpop.f32.mrf.mxu0
  %v97 = vadd.f32 0.0, %v96
  %98 = vmatmul.f32.gmra.mxu0 %v71
  %v99 = vpop.f32.mrf.mxu0
  %v100 = vadd.f32 0.0, %v99
  %101 = vmatmul.f32.gmra.mxu0 %v74
  %v102 = vpop.f32.mrf.mxu0
  %v103 = vadd.f32 0.0, %v102
  %104 = vmatmul.f32.gmra.mxu0 %v77
  %v105 = vpop.f32.mrf.mxu0
  %v106 = vadd.f32 0.0, %v105
  %107 = vdwg.mxu0
  %v109 = vsel %vm35, %v42, 0
  %v112 = vsel %vm35, %v43, 0
  %v115 = vsel %vm35, %v44, 0
  %v118 = vsel %vm35, %v45, 0
  %120 = vmatpush.msra.mxu0 0.0
  %121 = vmatpush.msra.mxu0 0.0
  %122 = vmatpush.msra.mxu0 0.0
  %123 = vmatpush.msra.mxu0 0.0
  %124 = vmatpush.msra.mxu0 0.0
  %125 = vmatpush.msra.mxu0 0.0
  %126 = vmatpush.msra.mxu0 0.0
  %127 = vmatpush.msra.mxu0 0.0
  %128 = vmatpush.msra.mxu0 %v53
  %129 = vmatpush.msra.mxu0 %v52
  %130 = vmatpush.msra.mxu0 %v51
  %131 = vmatpush.msra.mxu0 %v50
  %132 = vmatpush.msra.mxu0 %v49
  %133 = vmatpush.msra.mxu0 %v48
  %134 = vmatpush.msra.mxu0 %v47
  %135 = vmatpush.msra.mxu0 %v46
  %136 = vmatmul.f32.gmra.mxu0 %v109
  %v137 = vpop.f32.mrf.mxu0
  %v138 = vadd.f32 %v97, %v137
  %139 = vmatmul.f32.gmra.mxu0 %v112
  %v140 = vpop.f32.mrf.mxu0
  %v141 = vadd.f32 %v100, %v140
  %142 = vmatmul.f32.gmra.mxu0 %v115
  %v143 = vpop.f32.mrf.mxu0
  %v144 = vadd.f32 %v103, %v143
  %145 = vmatmul.f32.gmra.mxu0 %v118
  %v146 = vpop.f32.mrf.mxu0
  %v147 = vadd.f32 %v106, %v146
  %148 = vdwg.mxu0
  %v149 = vld [vmem:[#allocation2 + $0x2] sm:$0xff]
  %v150 = vld [vmem:[#allocation2 + $0xa] sm:$0xff]
  %v151 = vld [vmem:[#allocation2 + $0x1a] sm:$0xff]
  %v152 = vld [vmem:[#allocation2 + $0x22] sm:$0xff]
  %s153 = scalar_lea.vmem %s1, 128
  %v154 = vld [vmem:[%s153] sm:$0xff]
  %v155 = vld [vmem:[%s153 + $0x8] sm:$0xff]
  %v156 = vld [vmem:[%s153 + $0x10] sm:$0xff]
  %v157 = vld [vmem:[%s153 + $0x18] sm:$0xff]
  %v158 = vld [vmem:[%s153 + $0x20] sm:$0xff]
  %v159 = vld [vmem:[%s153 + $0x28] sm:$0xff]
  %v160 = vld [vmem:[%s153 + $0x30] sm:$0xff]
  %v161 = vld [vmem:[%s153 + $0x38] sm:$0xff]
  %v163 = vsel %vm35, %v149, 0
  %v166 = vsel %vm35, %v150, 0
  %v169 = vsel %vm35, %v151, 0
  %v172 = vsel %vm35, %v152, 0
  %174 = vmatpush.msra.mxu0 0.0
  %175 = vmatpush.msra.mxu0 0.0
  %176 = vmatpush.msra.mxu0 0.0
  %177 = vmatpush.msra.mxu0 0.0
  %178 = vmatpush.msra.mxu0 0.0
  %179 = vmatpush.msra.mxu0 0.0
  %180 = vmatpush.msra.mxu0 0.0
  %181 = vmatpush.msra.mxu0 0.0
  %182 = vmatpush.msra.mxu0 %v161
  %183 = vmatpush.msra.mxu0 %v160
  %184 = vmatpush.msra.mxu0 %v159
  %185 = vmatpush.msra.mxu0 %v158
  %186 = vmatpush.msra.mxu0 %v157
  %187 = vmatpush.msra.mxu0 %v156
  %188 = vmatpush.msra.mxu0 %v155
  %189 = vmatpush.msra.mxu0 %v154
  %190 = vmatmul.f32.gmra.mxu0 %v163
  %v191 = vpop.f32.mrf.mxu0
  %v192 = vadd.f32 0.0, %v191
  %193 = vmatmul.f32.gmra.mxu0 %v166
  %v194 = vpop.f32.mrf.mxu0
  %v195 = vadd.f32 0.0, %v194
  %196 = vmatmul.f32.gmra.mxu0 %v169
  %v197 = vpop.f32.mrf.mxu0
  %v198 = vadd.f32 0.0, %v197
  %199 = vmatmul.f32.gmra.mxu0 %v172
  %v200 = vpop.f32.mrf.mxu0
  %v201 = vadd.f32 0.0, %v200
  %202 = vdwg.mxu0
  %v203 = vadd.f32 %v138, %v192
  %v204 = vadd.f32 %v141, %v195
  %v205 = vadd.f32 %v144, %v198
  %v206 = vadd.f32 %v147, %v201
  %v207 = vadd.f32 %v203, %v204
  %v208 = vadd.f32 %v207, %v205
  %v209 = vadd.f32 %v208, %v206
  %v210 = vrot.slane %v209, 4
  %v211 = vadd.f32 %v209, %v210
  %v212 = vrot.slane %v211, 2
  %v213 = vadd.f32 %v211, %v212
  %v214 = vrot.slane %v213, 1
  %v215 = vadd.f32 %v213, %v214
  %216 = vrot.lane.b32.xlu0 %v215, 8
  %v217 = vpop.permute.xlu0 %216
  %v218 = vadd.f32 %v215, %v217
  %219 = vrot.lane.b32.xlu0 %v215, 16
  %v220 = vpop.permute.xlu0 %219
  %v221 = vadd.f32 %v218, %v220
  %222 = vrot.lane.b32.xlu0 %v215, 24
  %v223 = vpop.permute.xlu0 %222
  %v224 = vadd.f32 %v221, %v223
  %225 = vrot.lane.b32.xlu0 %v215, 32
  %v226 = vpop.permute.xlu0 %225
  %v227 = vadd.f32 %v224, %v226
  %228 = vrot.lane.b32.xlu0 %v215, 40
  %v229 = vpop.permute.xlu0 %228
  %v230 = vadd.f32 %v227, %v229
  %231 = vrot.lane.b32.xlu0 %v215, 48
  %v232 = vpop.permute.xlu0 %231
  %v233 = vadd.f32 %v230, %v232
  %234 = vrot.lane.b32.xlu0 %v215, 56
  %v235 = vpop.permute.xlu0 %234
  %v236 = vadd.f32 %v233, %v235
  %237 = vrot.lane.b32.xlu0 %v215, 64
  %v238 = vpop.permute.xlu0 %237
  %v239 = vadd.f32 %v236, %v238
  %240 = vrot.lane.b32.xlu0 %v215, 72
  %v241 = vpop.permute.xlu0 %240
  %v242 = vadd.f32 %v239, %v241
  %243 = vrot.lane.b32.xlu0 %v215, 80
  %v244 = vpop.permute.xlu0 %243
  %v245 = vadd.f32 %v242, %v244
  %246 = vrot.lane.b32.xlu0 %v215, 88
  %v247 = vpop.permute.xlu0 %246
  %v248 = vadd.f32 %v245, %v247
  %249 = vrot.lane.b32.xlu0 %v215, 96
  %v250 = vpop.permute.xlu0 %249
  %v251 = vadd.f32 %v248, %v250
  %252 = vrot.lane.b32.xlu0 %v215, 104
  %v253 = vpop.permute.xlu0 %252
  %v254 = vadd.f32 %v251, %v253
  %255 = vrot.lane.b32.xlu0 %v215, 112
  %v256 = vpop.permute.xlu0 %255
  %v257 = vadd.f32 %v254, %v256
  %258 = vrot.lane.b32.xlu0 %v215, 120
  %v259 = vpop.permute.xlu0 %258
  %v260 = vadd.f32 %v257, %v259
  %v261 = vrcp.pop 512.0
  %v262 = vmul.f32 512.0, %v261
  %v263 = vsub.f32 1.0, %v262
  %v264 = vmul.f32 %v261, %v263
  %v265 = vadd.f32 %v261, %v264
  %vm266 = vweird.f32 %v261
  %v267 = vsel %vm266, %v261, %v265
  %v268 = vmul.f32 %v260, %v267
  %v269 = vperm.slane %v268, 0
  %v270 = vsub.f32 %v203, %v269
  %v271 = vsub.f32 %v204, %v269
  %v272 = vsub.f32 %v205, %v269
  %v273 = vsub.f32 %v206, %v269
  %v274 = vmul.f32 %v270, %v270
  %v275 = vmul.f32 %v271, %v271
  %v276 = vmul.f32 %v272, %v272
  %v277 = vmul.f32 %v273, %v273
  %v278 = vadd.f32 %v274, %v275
  %v279 = vadd.f32 %v278, %v276
  %v280 = vadd.f32 %v279, %v277
  %v281 = vrot.slane %v280, 4
  %v282 = vadd.f32 %v280, %v281
  %v283 = vrot.slane %v282, 2
  %v284 = vadd.f32 %v282, %v283
  %v285 = vrot.slane %v284, 1
  %v286 = vadd.f32 %v284, %v285
  %287 = vrot.lane.b32.xlu0 %v286, 8
  %v288 = vpop.permute.xlu0 %287
  %v289 = vadd.f32 %v286, %v288
  %290 = vrot.lane.b32.xlu0 %v286, 16
  %v291 = vpop.permute.xlu0 %290
  %v292 = vadd.f32 %v289, %v291
  %293 = vrot.lane.b32.xlu0 %v286, 24
  %v294 = vpop.permute.xlu0 %293
  %v295 = vadd.f32 %v292, %v294
  %296 = vrot.lane.b32.xlu0 %v286, 32
  %v297 = vpop.permute.xlu0 %296
  %v298 = vadd.f32 %v295, %v297
  %299 = vrot.lane.b32.xlu0 %v286, 40
  %v300 = vpop.permute.xlu0 %299
  %v301 = vadd.f32 %v298, %v300
  %302 = vrot.lane.b32.xlu0 %v286, 48
  %v303 = vpop.permute.xlu0 %302
  %v304 = vadd.f32 %v301, %v303
  %305 = vrot.lane.b32.xlu0 %v286, 56
  %v306 = vpop.permute.xlu0 %305
  %v307 = vadd.f32 %v304, %v306
  %308 = vrot.lane.b32.xlu0 %v286, 64
  %v309 = vpop.permute.xlu0 %308
  %v310 = vadd.f32 %v307, %v309
  %311 = vrot.lane.b32.xlu0 %v286, 72
  %v312 = vpop.permute.xlu0 %311
  %v313 = vadd.f32 %v310, %v312
  %314 = vrot.lane.b32.xlu0 %v286, 80
  %v315 = vpop.permute.xlu0 %314
  %v316 = vadd.f32 %v313, %v315
  %317 = vrot.lane.b32.xlu0 %v286, 88
  %v318 = vpop.permute.xlu0 %317
  %v319 = vadd.f32 %v316, %v318
  %320 = vrot.lane.b32.xlu0 %v286, 96
  %v321 = vpop.permute.xlu0 %320
  %v322 = vadd.f32 %v319, %v321
  %323 = vrot.lane.b32.xlu0 %v286, 104
  %v324 = vpop.permute.xlu0 %323
  %v325 = vadd.f32 %v322, %v324
  %326 = vrot.lane.b32.xlu0 %v286, 112
  %v327 = vpop.permute.xlu0 %326
  %v328 = vadd.f32 %v325, %v327
  %329 = vrot.lane.b32.xlu0 %v286, 120
  %v330 = vpop.permute.xlu0 %329
  %v331 = vadd.f32 %v328, %v330
  %v332 = vmul.f32 %v331, %v267
  %v333 = vadd.f32 %v332, 1e-05
  %v334 = vrsqrt.pop %v333
  %v335 = vmul.f32 %v334, %v333
  %v336 = vmul.f32 %v335, %v334
  %v337 = vmul.f32 0.5, %v336
  %v338 = vsub.f32 1.5, %v337
  %v339 = vmul.f32 %v334, %v338
  %vm340 = vweird.f32 %v333
  %vm341 = vweird.f32 %v334
  %vm342 = vmor %vm340, %vm341
  %v343 = vsel %vm342, %v334, %v339
  %v344 = vmul.f32 %v40, %v343
  %v345 = vmul.f32 %v268, %v344
  %v346 = vsub.f32 %v41, %v345
  %v348 = vperm.slane %v344, 0
  %v350 = vmul.f32 %v203, %v348
  %v351 = vmul.f32 %v204, %v348
  %v352 = vmul.f32 %v205, %v348
  %v353 = vmul.f32 %v206, %v348
  %v355 = vperm.slane %v346, 0
  %v357 = vadd.f32 %v350, %v355
  %v358 = vadd.f32 %v351, %v355
  %v359 = vadd.f32 %v352, %v355
  %v360 = vadd.f32 %v353, %v355
  %v361 = vmax.f32 %v357, 0.0
  %v362 = vmax.f32 %v358, 0.0
  %v363 = vmax.f32 %v359, 0.0
  %v364 = vmax.f32 %v360, 0.0
  %365 = vst [vmem:[#allocation3] sm:$0x1] 0.0
  %366 = vst [vmem:[#allocation3 + $0x18] sm:$0x1] 0.0
  %367 = vst [vmem:[#allocation3 + $0x11] sm:$0x1] 0.0
  %368 = vst [vmem:[#allocation3 + $0x29] sm:$0x1] 0.0
  %369 = vst [vmem:[#allocation3 + $0x1] sm:$0xff] %v361
  %370 = vst [vmem:[#allocation3 + $0x9] sm:$0xff] %v362
  %371 = vst [vmem:[#allocation3 + $0x19] sm:$0xff] %v363
  %372 = vst [vmem:[#allocation3 + $0x21] sm:$0xff] %v364
  %v373 = vld [vmem:[%s5] sm:$0x1]
  %v374 = vld [vmem:[%s6] sm:$0x1]
  %v375 = vld [vmem:[#allocation3] sm:$0xff]
  %v376 = vld [vmem:[#allocation3 + $0x8] sm:$0xff]
  %v377 = vld [vmem:[#allocation3 + $0x18] sm:$0xff]
  %v378 = vld [vmem:[#allocation3 + $0x20] sm:$0xff]
  %v379 = vld [vmem:[%s4] sm:$0xff]
  %v380 = vld [vmem:[%s4 + $0x8] sm:$0xff]
  %v381 = vld [vmem:[%s4 + $0x10] sm:$0xff]
  %v382 = vld [vmem:[%s4 + $0x18] sm:$0xff]
  %v383 = vld [vmem:[%s4 + $0x20] sm:$0xff]
  %v384 = vld [vmem:[%s4 + $0x28] sm:$0xff]
  %v385 = vld [vmem:[%s4 + $0x30] sm:$0xff]
  %v386 = vld [vmem:[%s4 + $0x38] sm:$0xff]
  %v387 = vld [vmem:[%s4 + $0x40] sm:$0xff]
  %v388 = vld [vmem:[%s4 + $0x48] sm:$0xff]
  %v389 = vld [vmem:[%s4 + $0x50] sm:$0xff]
  %v390 = vld [vmem:[%s4 + $0x58] sm:$0xff]
  %v391 = vld [vmem:[%s4 + $0x60] sm:$0xff]
  %v392 = vld [vmem:[%s4 + $0x68] sm:$0xff]
  %v393 = vld [vmem:[%s4 + $0x70] sm:$0xff]
  %v394 = vld [vmem:[%s4 + $0x78] sm:$0xff]
  %v395 = vld [vmem:[#allocation3 + $0x1] sm:$0xff]
  %v396 = vld [vmem:[#allocation3 + $0x9] sm:$0xff]
  %v397 = vld [vmem:[#allocation3 + $0x19] sm:$0xff]
  %v398 = vld [vmem:[#allocation3 + $0x21] sm:$0xff]
  %s399 = scalar_lea.vmem %s4, 128
  %v400 = vld [vmem:[%s399] sm:$0xff]
  %v401 = vld [vmem:[%s399 + $0x8] sm:$0xff]
  %v402 = vld [vmem:[%s399 + $0x10] sm:$0xff]
  %v403 = vld [vmem:[%s399 + $0x18] sm:$0xff]
  %v404 = vld [vmem:[%s399 + $0x20] sm:$0xff]
  %v405 = vld [vmem:[%s399 + $0x28] sm:$0xff]
  %v406 = vld [vmem:[%s399 + $0x30] sm:$0xff]
  %v407 = vld [vmem:[%s399 + $0x38] sm:$0xff]
  %v408 = vld [vmem:[%s399 + $0x40] sm:$0xff]
  %v409 = vld [vmem:[%s399 + $0x48] sm:$0xff]
  %v410 = vld [vmem:[%s399 + $0x50] sm:$0xff]
  %v411 = vld [vmem:[%s399 + $0x58] sm:$0xff]
  %v412 = vld [vmem:[%s399 + $0x60] sm:$0xff]
  %v413 = vld [vmem:[%s399 + $0x68] sm:$0xff]
  %v414 = vld [vmem:[%s399 + $0x70] sm:$0xff]
  %v415 = vld [vmem:[%s399 + $0x78] sm:$0xff]
  %416 = vmatpush.msra.mxu0 %v415
  %417 = vmatpush.msra.mxu0 %v414
  %418 = vmatpush.msra.mxu0 %v413
  %419 = vmatpush.msra.mxu0 %v412
  %420 = vmatpush.msra.mxu0 %v411
  %421 = vmatpush.msra.mxu0 %v410
  %422 = vmatpush.msra.mxu0 %v409
  %423 = vmatpush.msra.mxu0 %v408
  %424 = vmatpush.msra.mxu0 %v407
  %425 = vmatpush.msra.mxu0 %v406
  %426 = vmatpush.msra.mxu0 %v405
  %427 = vmatpush.msra.mxu0 %v404
  %428 = vmatpush.msra.mxu0 %v403
  %429 = vmatpush.msra.mxu0 %v402
  %430 = vmatpush.msra.mxu0 %v401
  %431 = vmatpush.msra.mxu0 %v400
  %432 = vmatmul.f32.gmra.mxu0 %v395
  %v433 = vpop.f32.mrf.mxu0
  %v434 = vadd.f32 0.0, %v433
  %435 = vmatmul.f32.gmra.mxu0 %v396
  %v436 = vpop.f32.mrf.mxu0
  %v437 = vadd.f32 0.0, %v436
  %438 = vmatmul.f32.gmra.mxu0 %v397
  %v439 = vpop.f32.mrf.mxu0
  %v440 = vadd.f32 0.0, %v439
  %441 = vmatmul.f32.gmra.mxu0 %v398
  %v442 = vpop.f32.mrf.mxu0
  %v443 = vadd.f32 0.0, %v442
  %444 = vdwg.mxu0
  %445 = vmatpush.msra.mxu0 %v394
  %446 = vmatpush.msra.mxu0 %v393
  %447 = vmatpush.msra.mxu0 %v392
  %448 = vmatpush.msra.mxu0 %v391
  %449 = vmatpush.msra.mxu0 %v390
  %450 = vmatpush.msra.mxu0 %v389
  %451 = vmatpush.msra.mxu0 %v388
  %452 = vmatpush.msra.mxu0 %v387
  %453 = vmatpush.msra.mxu0 %v386
  %454 = vmatpush.msra.mxu0 %v385
  %455 = vmatpush.msra.mxu0 %v384
  %456 = vmatpush.msra.mxu0 %v383
  %457 = vmatpush.msra.mxu0 %v382
  %458 = vmatpush.msra.mxu0 %v381
  %459 = vmatpush.msra.mxu0 %v380
  %460 = vmatpush.msra.mxu0 %v379
  %461 = vmatmul.f32.gmra.mxu0 %v375
  %v462 = vpop.f32.mrf.mxu0
  %v463 = vadd.f32 %v434, %v462
  %464 = vmatmul.f32.gmra.mxu0 %v376
  %v465 = vpop.f32.mrf.mxu0
  %v466 = vadd.f32 %v437, %v465
  %467 = vmatmul.f32.gmra.mxu0 %v377
  %v468 = vpop.f32.mrf.mxu0
  %v469 = vadd.f32 %v440, %v468
  %470 = vmatmul.f32.gmra.mxu0 %v378
  %v471 = vpop.f32.mrf.mxu0
  %v472 = vadd.f32 %v443, %v471
  %473 = vdwg.mxu0
  %v474 = vld [vmem:[#allocation3 + $0x2] sm:$0xff]
  %v475 = vld [vmem:[#allocation3 + $0xa] sm:$0xff]
  %v476 = vld [vmem:[#allocation3 + $0x1a] sm:$0xff]
  %v477 = vld [vmem:[#allocation3 + $0x22] sm:$0xff]
  %s478 = scalar_lea.vmem %s4, 256
  %v479 = vld [vmem:[%s478] sm:$0xff]
  %v480 = vld [vmem:[%s478 + $0x8] sm:$0xff]
  %v481 = vld [vmem:[%s478 + $0x10] sm:$0xff]
  %v482 = vld [vmem:[%s478 + $0x18] sm:$0xff]
  %v483 = vld [vmem:[%s478 + $0x20] sm:$0xff]
  %v484 = vld [vmem:[%s478 + $0x28] sm:$0xff]
  %v485 = vld [vmem:[%s478 + $0x30] sm:$0xff]
  %v486 = vld [vmem:[%s478 + $0x38] sm:$0xff]
  %v487 = vld [vmem:[%s478 + $0x40] sm:$0xff]
  %v488 = vld [vmem:[%s478 + $0x48] sm:$0xff]
  %v489 = vld [vmem:[%s478 + $0x50] sm:$0xff]
  %v490 = vld [vmem:[%s478 + $0x58] sm:$0xff]
  %v491 = vld [vmem:[%s478 + $0x60] sm:$0xff]
  %v492 = vld [vmem:[%s478 + $0x68] sm:$0xff]
  %v493 = vld [vmem:[%s478 + $0x70] sm:$0xff]
  %v494 = vld [vmem:[%s478 + $0x78] sm:$0xff]
  %495 = vmatpush.msra.mxu0 %v494
  %496 = vmatpush.msra.mxu0 %v493
  %497 = vmatpush.msra.mxu0 %v492
  %498 = vmatpush.msra.mxu0 %v491
  %499 = vmatpush.msra.mxu0 %v490
  %500 = vmatpush.msra.mxu0 %v489
  %501 = vmatpush.msra.mxu0 %v488
  %502 = vmatpush.msra.mxu0 %v487
  %503 = vmatpush.msra.mxu0 %v486
  %504 = vmatpush.msra.mxu0 %v485
  %505 = vmatpush.msra.mxu0 %v484
  %506 = vmatpush.msra.mxu0 %v483
  %507 = vmatpush.msra.mxu0 %v482
  %508 = vmatpush.msra.mxu0 %v481
  %509 = vmatpush.msra.mxu0 %v480
  %510 = vmatpush.msra.mxu0 %v479
  %511 = vmatmul.f32.gmra.mxu0 %v474
  %v512 = vpop.f32.mrf.mxu0
  %v513 = vadd.f32 0.0, %v512
  %514 = vmatmul.f32.gmra.mxu0 %v475
  %v515 = vpop.f32.mrf.mxu0
  %v516 = vadd.f32 0.0, %v515
  %517 = vmatmul.f32.gmra.mxu0 %v476
  %v518 = vpop.f32.mrf.mxu0
  %v519 = vadd.f32 0.0, %v518
  %520 = vmatmul.f32.gmra.mxu0 %v477
  %v521 = vpop.f32.mrf.mxu0
  %v522 = vadd.f32 0.0, %v521
  %523 = vdwg.mxu0
  %v524 = vadd.f32 %v463, %v513
  %v525 = vadd.f32 %v466, %v516
  %v526 = vadd.f32 %v469, %v519
  %v527 = vadd.f32 %v472, %v522
  %v528 = vadd.f32 %v524, %v525
  %v529 = vadd.f32 %v528, %v526
  %v530 = vadd.f32 %v529, %v527
  %v531 = vrot.slane %v530, 4
  %v532 = vadd.f32 %v530, %v531
  %v533 = vrot.slane %v532, 2
  %v534 = vadd.f32 %v532, %v533
  %v535 = vrot.slane %v534, 1
  %v536 = vadd.f32 %v534, %v535
  %537 = vrot.lane.b32.xlu0 %v536, 8
  %v538 = vpop.permute.xlu0 %537
  %v539 = vadd.f32 %v536, %v538
  %540 = vrot.lane.b32.xlu0 %v536, 16
  %v541 = vpop.permute.xlu0 %540
  %v542 = vadd.f32 %v539, %v541
  %543 = vrot.lane.b32.xlu0 %v536, 24
  %v544 = vpop.permute.xlu0 %543
  %v545 = vadd.f32 %v542, %v544
  %546 = vrot.lane.b32.xlu0 %v536, 32
  %v547 = vpop.permute.xlu0 %546
  %v548 = vadd.f32 %v545, %v547
  %549 = vrot.lane.b32.xlu0 %v536, 40
  %v550 = vpop.permute.xlu0 %549
  %v551 = vadd.f32 %v548, %v550
  %552 = vrot.lane.b32.xlu0 %v536, 48
  %v553 = vpop.permute.xlu0 %552
  %v554 = vadd.f32 %v551, %v553
  %555 = vrot.lane.b32.xlu0 %v536, 56
  %v556 = vpop.permute.xlu0 %555
  %v557 = vadd.f32 %v554, %v556
  %558 = vrot.lane.b32.xlu0 %v536, 64
  %v559 = vpop.permute.xlu0 %558
  %v560 = vadd.f32 %v557, %v559
  %561 = vrot.lane.b32.xlu0 %v536, 72
  %v562 = vpop.permute.xlu0 %561
  %v563 = vadd.f32 %v560, %v562
  %564 = vrot.lane.b32.xlu0 %v536, 80
  %v565 = vpop.permute.xlu0 %564
  %v566 = vadd.f32 %v563, %v565
  %567 = vrot.lane.b32.xlu0 %v536, 88
  %v568 = vpop.permute.xlu0 %567
  %v569 = vadd.f32 %v566, %v568
  %570 = vrot.lane.b32.xlu0 %v536, 96
  %v571 = vpop.permute.xlu0 %570
  %v572 = vadd.f32 %v569, %v571
  %573 = vrot.lane.b32.xlu0 %v536, 104
  %v574 = vpop.permute.xlu0 %573
  %v575 = vadd.f32 %v572, %v574
  %576 = vrot.lane.b32.xlu0 %v536, 112
  %v577 = vpop.permute.xlu0 %576
  %v578 = vadd.f32 %v575, %v577
  %579 = vrot.lane.b32.xlu0 %v536, 120
  %v580 = vpop.permute.xlu0 %579
  %v581 = vadd.f32 %v578, %v580
  %v582 = vmul.f32 %v581, %v267
  %v583 = vperm.slane %v582, 0
  %v584 = vsub.f32 %v524, %v583
  %v585 = vsub.f32 %v525, %v583
  %v586 = vsub.f32 %v526, %v583
  %v587 = vsub.f32 %v527, %v583
  %v588 = vmul.f32 %v584, %v584
  %v589 = vmul.f32 %v585, %v585
  %v590 = vmul.f32 %v586, %v586
  %v591 = vmul.f32 %v587, %v587
  %v592 = vadd.f32 %v588, %v589
  %v593 = vadd.f32 %v592, %v590
  %v594 = vadd.f32 %v593, %v591
  %v595 = vrot.slane %v594, 4
  %v596 = vadd.f32 %v594, %v595
  %v597 = vrot.slane %v596, 2
  %v598 = vadd.f32 %v596, %v597
  %v599 = vrot.slane %v598, 1
  %v600 = vadd.f32 %v598, %v599
  %601 = vrot.lane.b32.xlu0 %v600, 8
  %v602 = vpop.permute.xlu0 %601
  %v603 = vadd.f32 %v600, %v602
  %604 = vrot.lane.b32.xlu0 %v600, 16
  %v605 = vpop.permute.xlu0 %604
  %v606 = vadd.f32 %v603, %v605
  %607 = vrot.lane.b32.xlu0 %v600, 24
  %v608 = vpop.permute.xlu0 %607
  %v609 = vadd.f32 %v606, %v608
  %610 = vrot.lane.b32.xlu0 %v600, 32
  %v611 = vpop.permute.xlu0 %610
  %v612 = vadd.f32 %v609, %v611
  %613 = vrot.lane.b32.xlu0 %v600, 40
  %v614 = vpop.permute.xlu0 %613
  %v615 = vadd.f32 %v612, %v614
  %616 = vrot.lane.b32.xlu0 %v600, 48
  %v617 = vpop.permute.xlu0 %616
  %v618 = vadd.f32 %v615, %v617
  %619 = vrot.lane.b32.xlu0 %v600, 56
  %v620 = vpop.permute.xlu0 %619
  %v621 = vadd.f32 %v618, %v620
  %622 = vrot.lane.b32.xlu0 %v600, 64
  %v623 = vpop.permute.xlu0 %622
  %v624 = vadd.f32 %v621, %v623
  %625 = vrot.lane.b32.xlu0 %v600, 72
  %v626 = vpop.permute.xlu0 %625
  %v627 = vadd.f32 %v624, %v626
  %628 = vrot.lane.b32.xlu0 %v600, 80
  %v629 = vpop.permute.xlu0 %628
  %v630 = vadd.f32 %v627, %v629
  %631 = vrot.lane.b32.xlu0 %v600, 88
  %v632 = vpop.permute.xlu0 %631
  %v633 = vadd.f32 %v630, %v632
  %634 = vrot.lane.b32.xlu0 %v600, 96
  %v635 = vpop.permute.xlu0 %634
  %v636 = vadd.f32 %v633, %v635
  %637 = vrot.lane.b32.xlu0 %v600, 104
  %v638 = vpop.permute.xlu0 %637
  %v639 = vadd.f32 %v636, %v638
  %640 = vrot.lane.b32.xlu0 %v600, 112
  %v641 = vpop.permute.xlu0 %640
  %v642 = vadd.f32 %v639, %v641
  %643 = vrot.lane.b32.xlu0 %v600, 120
  %v644 = vpop.permute.xlu0 %643
  %v645 = vadd.f32 %v642, %v644
  %v646 = vmul.f32 %v645, %v267
  %v647 = vadd.f32 %v646, 1e-05
  %v648 = vrsqrt.pop %v647
  %v649 = vmul.f32 %v648, %v647
  %v650 = vmul.f32 %v649, %v648
  %v651 = vmul.f32 0.5, %v650
  %v652 = vsub.f32 1.5, %v651
  %v653 = vmul.f32 %v648, %v652
  %vm654 = vweird.f32 %v647
  %vm655 = vweird.f32 %v648
  %vm656 = vmor %vm654, %vm655
  %v657 = vsel %vm656, %v648, %v653
  %v658 = vmul.f32 %v373, %v657
  %v659 = vmul.f32 %v582, %v658
  %v660 = vsub.f32 %v374, %v659
  %v662 = vperm.slane %v658, 0
  %v664 = vmul.f32 %v524, %v662
  %v665 = vmul.f32 %v525, %v662
  %v666 = vmul.f32 %v526, %v662
  %v667 = vmul.f32 %v527, %v662
  %v669 = vperm.slane %v660, 0
  %v671 = vadd.f32 %v664, %v669
  %v672 = vadd.f32 %v665, %v669
  %v673 = vadd.f32 %v666, %v669
  %v674 = vadd.f32 %v667, %v669
  %v675 = vmax.f32 %v671, 0.0
  %v676 = vmax.f32 %v672, 0.0
  %v677 = vmax.f32 %v673, 0.0
  %v678 = vmax.f32 %v674, 0.0
  %679 = vst [vmem:[%s7] sm:$0xff] %v675
  %680 = vst [vmem:[%s7 + $0x8] sm:$0xff] %v676
  %681 = vst [vmem:[%s7 + $0x10] sm:$0xff] %v677
  %682 = vst [vmem:[%s7 + $0x18] sm:$0xff] %v678
  // Predicated region
  $region30: #{double_conv.1} parent=0 // pred_check
    _
  $region31: #{double_conv.1} parent=0 // pred_check_branch
    %684 = sbr.rel (0) target = $region33
  $region32: #{double_conv.1} parent=0 // pred_region
    _
  $region33: #{double_conv.1} parent=0 // pred_fallthru
    _
  // Predicated region
  $region34: #{double_conv.1} parent=0 // pred_check
    _
  $region35: #{double_conv.1} parent=0 // pred_check_branch
    %686 = sbr.rel (0) target = $region37
  $region36: #{double_conv.1} parent=0 // pred_region
    _
  $region37: #{double_conv.1} parent=0 // pred_fallthru
    _

</llo_original>
